<compile_context>
chip_gen: v6e
topology: v6e:2x2x1
jax: 0.10.0
libtpu: 0.0.40
codegen_flags: <defaults>
</compile_context>

<pallas_src>
import jax
import jax.numpy as jnp
from jax import lax
from jax.experimental import pallas as pl
from jax.experimental.pallas import tpu as pltpu


def centroid_loss_kernel(h_ref, c_ref, cn_ref, y_ref, out_ref):
    """Per-tile body: out[n] = distance[n] + logsumexp_k(-sqrt(ns[n,k]))."""
    # NOTE: for bf16 inputs one would feed bf16 straight to the MXU (f32
    # accumulation via preferred_element_type); with f32 inputs (the module's
    # case) these casts are no-ops.
    h = h_ref[...].astype(jnp.float32)            # (TN, D)  streamed sample tile
    c = c_ref[...].astype(jnp.float32)            # (K, D)   centroids (resident)
    cn = cn_ref[...]                              # (K, 1)   precomputed ||C_k||^2
    y = y_ref[...]                                # (1, TN)  int32 labels (lane-dense)

    tn, d = h.shape
    k = c.shape[0]
    ones_row = jnp.ones((1, d), dtype=jnp.float32)

    # Pairwise squared distances in (K, TN) layout (class on sublanes, sample
    # lane-dense).  Both dot_generals contract on the minor dim of both
    # operands (flash-attention score pattern) -> no relayout of the big tile.
    cross = lax.dot_general(c, h, (((1,), (1,)), ((), ())),
                            preferred_element_type=jnp.float32)          # (K, TN)
    hn = lax.dot_general(ones_row, h * h, (((1,), (1,)), ((), ())),
                         preferred_element_type=jnp.float32)             # (1, TN)
    # TODO(synk): ||c||^2 + ||h||^2 - 2 c.h can lose precision for
    # near-coincident points vs. the reference's direct (h - c)^2 sum.
    ns = jnp.maximum(cn + hn - 2.0 * cross, 0.0)                         # (K, TN)

    # distance at label y via one-hot select (reduce over the small K axis).
    # TODO(synk): out-of-range labels silently contribute 0 here instead of
    # erroring like torch.gather would.
    class_ids = lax.broadcasted_iota(jnp.int32, (k, tn), 0)              # (K, TN)
    distance = jnp.sum(jnp.where(class_ids == y, ns, 0.0),
                       axis=0, keepdims=True)                            # (1, TN)

    # logsumexp over classes of -sqrt(norm_squared)
    neg = -jnp.sqrt(ns)                                                  # (K, TN)
    m = jnp.max(neg, axis=0, keepdims=True)                              # (1, TN)
    logsum = m + jnp.log(jnp.sum(jnp.exp(neg - m), axis=0, keepdims=True))

    out_ref[...] = distance + logsum                                     # (1, TN)


def _pick_tile(n, d):
    """Largest sample tile whose double-buffered h stream stays ~16 MiB of
    VMEM.  A (tn, d) f32 block with d < 128 occupies tn * 128 * 4 bytes due to
    lane padding, so this budget is safe even on v7x (64 MiB physical VMEM)
    while still giving tn = 16384 for d <= 128."""
    lane_d = ((d + 127) // 128) * 128
    cap = (16 * 1024 * 1024) // (2 * lane_d * 4)
    cap = max(512, (cap // 512) * 512)            # lane-aligned tile
    if n <= cap:
        return max(8, ((n + 7) // 8) * 8)         # single (8-aligned) tile
    return cap


def centroid_loss(h, centers, y, *, rho=1.0, tile=None):
    """h: (N, feat_dim), centers: (num_classes, feat_dim), y: (N,) int."""
    n, d = h.shape
    k = centers.shape[0]

    if tile is None:
        tn = _pick_tile(n, d)
    else:
        assert tile % 128 == 0, "explicit tile must be a multiple of 128"
        tn = tile

    n_pad = -(-n // tn) * tn
    pad = n_pad - n

    h_p = jnp.pad(h, ((0, pad), (0, 0)))
    y_row = jnp.pad(y.astype(jnp.int32), ((0, pad),)).reshape(1, n_pad)

    c32 = centers.astype(jnp.float32)
    cn = jnp.sum(c32 * c32, axis=1, keepdims=True)                       # (K, 1)

    vals = pl.pallas_call(
        centroid_loss_kernel,
        out_shape=jax.ShapeDtypeStruct((1, n_pad), jnp.float32),
        grid_spec=pltpu.PrefetchScalarGridSpec(
            num_scalar_prefetch=0,
            grid=(n_pad // tn,),
            in_specs=[
                pl.BlockSpec((tn, d), lambda i: (i, 0)),    # h tile (streamed)
                pl.BlockSpec((k, d), lambda i: (0, 0)),     # centers (resident)
                pl.BlockSpec((k, 1), lambda i: (0, 0)),     # ||C_k||^2 (resident)
                pl.BlockSpec((1, tn), lambda i: (0, i)),    # labels (lane-dense)
            ],
            out_specs=pl.BlockSpec((1, tn), lambda i: (0, i)),
        ),
        compiler_params=pltpu.CompilerParams(
            dimension_semantics=("parallel",),               # independent tiles
            vmem_limit_bytes=40 * 1024 * 1024,
        ),
    )(h_p, c32, cn, y_row)

    # Padded columns are simply dropped; mean over the true N.
    loss = jnp.sum(vals[0, :n]) / n

    # Regularizer: tiny K x K problem, done in plain JAX (direct differences,
    # no cancellation; min-before-log is identical since log is monotone).
    diff = c32[:, None, :] - c32[None, :, :]
    pdist = jnp.sum(diff * diff, axis=-1)
    pdist = jnp.where(jnp.eye(k, dtype=bool), jnp.inf, pdist)
    reg = jnp.sum(-jnp.log(jnp.min(pdist, axis=-1)))

    return loss + rho * reg


def centroid_loss_ref(h, centers, y, rho=1.0):
    """Plain-JAX reference mirroring the PyTorch forward."""
    h = h.astype(jnp.float32)
    c = centers.astype(jnp.float32)
    ns = jnp.sum((h[:, None, :] - c[None, :, :]) ** 2, axis=2)           # (N, K)
    dist = jnp.take_along_axis(ns, y[:, None].astype(jnp.int32), axis=1)[:, 0]
    logsum = jax.scipy.special.logsumexp(-jnp.sqrt(ns), axis=1)
    loss = jnp.mean(dist + logsum)
    kk = c.shape[0]
    pd = jnp.sum((c[:, None, :] - c[None, :, :]) ** 2, axis=2)
    pd = jnp.where(jnp.eye(kk, dtype=bool), jnp.inf, pd)
    reg = jnp.sum(-jnp.min(jnp.log(pd), axis=-1))
    return loss + rho * reg


if __name__ == "__main__":
    key = jax.random.PRNGKey(0)
    k_h, k_c, k_y, k_h2, k_y2 = jax.random.split(key, 5)

    # ---- small single-tile case (matches module scale) ----
    N, FEAT_DIM, NUM_CLASSES = 8, 32, 4
    h = jax.random.normal(k_h, (N, FEAT_DIM), dtype=jnp.float32)
    centers = jax.random.normal(k_c, (NUM_CLASSES, FEAT_DIM), dtype=jnp.float32)
    y = jax.random.randint(k_y, (N,), 0, NUM_CLASSES, dtype=jnp.int32)

    out = jax.block_until_ready(centroid_loss(h, centers, y))
    ref = centroid_loss_ref(h, centers, y)
    assert jnp.allclose(out, ref, rtol=1e-3, atol=1e-3), (out, ref)

    # ---- multi-tile case: exercises the parallel grid, lane-aligned tiles,
    #      padding slice-off, and the wrapper-side reduction/regularizer ----
    N2 = 200
    h2 = jax.random.normal(k_h2, (N2, FEAT_DIM), dtype=jnp.float32)
    y2 = jax.random.randint(k_y2, (N2,), 0, NUM_CLASSES, dtype=jnp.int32)

    out2 = jax.block_until_ready(centroid_loss(h2, centers, y2, tile=128))
    ref2 = centroid_loss_ref(h2, centers, y2)
    assert jnp.allclose(out2, ref2, rtol=1e-3, atol=1e-3), (out2, ref2)

    print("KERNEL_OK")
</pallas_src>

<mosaic_0001>
module attributes {stable_mosaic.version = 11 : i64} {
  func.func @centroid_loss_kernel(%arg0: i32, %arg1: memref<8x32xf32, #tpu.memory_space<vmem>>, %arg2: memref<4x32xf32, #tpu.memory_space<vmem>>, %arg3: memref<4x1xf32, #tpu.memory_space<vmem>>, %arg4: memref<1x8xi32, #tpu.memory_space<vmem>>, %arg5: memref<1x8xf32, #tpu.memory_space<vmem>>) attributes {dimension_semantics = [#tpu.dimension_semantics<parallel>], iteration_bounds = array<i64: 1>, scalar_prefetch = 0 : i64, scratch_operands = 0 : i64, tpu.core_type = #tpu.core_type<tc>, window_params = [{transform_indices = @transform_0, window_bounds = array<i64: 8, 32>}, {pipeline_mode = #tpu.pipeline_mode<synchronous>, transform_indices = @transform_1, window_bounds = array<i64: 4, 32>}, {pipeline_mode = #tpu.pipeline_mode<synchronous>, transform_indices = @transform_2, window_bounds = array<i64: 4, 1>}, {transform_indices = @transform_3, window_bounds = array<i64: 1, 8>}, {transform_indices = @transform_4, window_bounds = array<i64: 1, 8>}]} {
    %c0 = arith.constant 0 : index
    %c0_0 = arith.constant 0 : index
    %0 = vector.load %arg1[%c0, %c0_0] : memref<8x32xf32, #tpu.memory_space<vmem>>, vector<8x32xf32>
    %c0_1 = arith.constant 0 : index
    %c0_2 = arith.constant 0 : index
    %1 = vector.load %arg2[%c0_1, %c0_2] : memref<4x32xf32, #tpu.memory_space<vmem>>, vector<4x32xf32>
    %c0_3 = arith.constant 0 : index
    %c0_4 = arith.constant 0 : index
    %2 = vector.load %arg3[%c0_3, %c0_4] : memref<4x1xf32, #tpu.memory_space<vmem>>, vector<4x1xf32>
    %c0_5 = arith.constant 0 : index
    %c0_6 = arith.constant 0 : index
    %3 = vector.load %arg4[%c0_5, %c0_6] : memref<1x8xi32, #tpu.memory_space<vmem>>, vector<1x8xi32>
    %cst = arith.constant 1.000000e+00 : f32
    %4 = vector.broadcast %cst : f32 to vector<1x32xf32>
    %cst_7 = arith.constant dense<0.000000e+00> : vector<4x8xf32>
    %5 = tpu.matmul %1, %0, %cst_7 {dimension_numbers = #tpu.dot_dimension_numbers<[1], [1], [0], [0], [0, 0, 1, 0], [], []>} : vector<4x32xf32>, vector<8x32xf32>, vector<4x8xf32> -> vector<4x8xf32>
    %6 = arith.mulf %0, %0 : vector<8x32xf32>
    %cst_8 = arith.constant dense<0.000000e+00> : vector<1x8xf32>
    %7 = tpu.matmul %4, %6, %cst_8 {dimension_numbers = #tpu.dot_dimension_numbers<[1], [1], [0], [0], [0, 0, 1, 0], [], []>} : vector<1x32xf32>, vector<8x32xf32>, vector<1x8xf32> -> vector<1x8xf32>
    %8 = vector.broadcast %2 : vector<4x1xf32> to vector<4x8xf32>
    %9 = vector.broadcast %7 : vector<1x8xf32> to vector<4x8xf32>
    %10 = arith.addf %8, %9 : vector<4x8xf32>
    %cst_9 = arith.constant 2.000000e+00 : f32
    %11 = vector.broadcast %cst_9 : f32 to vector<4x8xf32>
    %12 = arith.mulf %11, %5 : vector<4x8xf32>
    %13 = arith.subf %10, %12 : vector<4x8xf32>
    %cst_10 = arith.constant 0.000000e+00 : f32
    %14 = vector.broadcast %cst_10 : f32 to vector<4x8xf32>
    %15 = arith.maximumf %13, %14 : vector<4x8xf32>
    %16 = tpu.iota {dimensions = array<i32: 0>} : vector<4x8xi32>
    %17 = vector.broadcast %3 : vector<1x8xi32> to vector<4x8xi32>
    %18 = arith.cmpi eq, %16, %17 : vector<4x8xi32>
    %cst_11 = arith.constant 0.000000e+00 : f32
    %19 = vector.broadcast %cst_11 : f32 to vector<4x8xf32>
    %20 = arith.select %18, %15, %19 : vector<4x8xi1>, vector<4x8xf32>
    %cst_12 = arith.constant dense<0.000000e+00> : vector<8xf32>
    %21 = vector.multi_reduction <add>, %20, %cst_12 [0] : vector<4x8xf32> to vector<8xf32>
    %22 = vector.shape_cast %21 : vector<8xf32> to vector<1x8xf32>
    %23 = math.sqrt %15 : vector<4x8xf32>
    %cst_13 = arith.constant 0.000000e+00 : f32
    %24 = vector.broadcast %cst_13 : f32 to vector<4x8xf32>
    %25 = arith.subf %24, %23 : vector<4x8xf32>
    %cst_14 = arith.constant dense<0xFF800000> : vector<8xf32>
    %26 = vector.multi_reduction <maximumf>, %25, %cst_14 [0] : vector<4x8xf32> to vector<8xf32>
    %27 = vector.shape_cast %26 : vector<8xf32> to vector<1x8xf32>
    %28 = vector.broadcast %27 : vector<1x8xf32> to vector<4x8xf32>
    %29 = arith.subf %25, %28 : vector<4x8xf32>
    %30 = math.exp %29 : vector<4x8xf32>
    %cst_15 = arith.constant dense<0.000000e+00> : vector<8xf32>
    %31 = vector.multi_reduction <add>, %30, %cst_15 [0] : vector<4x8xf32> to vector<8xf32>
    %32 = vector.shape_cast %31 : vector<8xf32> to vector<1x8xf32>
    %33 = math.log %32 : vector<1x8xf32>
    %34 = arith.addf %27, %33 : vector<1x8xf32>
    %35 = arith.addf %22, %34 : vector<1x8xf32>
    %c0_16 = arith.constant 0 : index
    %c0_17 = arith.constant 0 : index
    %36 = vector.load %arg5[%c0_16, %c0_17] : memref<1x8xf32, #tpu.memory_space<vmem>>, vector<1x8xf32>
    tpu.vector_store %arg5[%c0_16, %c0_17], %35 {strides = array<i32>} : memref<1x8xf32, #tpu.memory_space<vmem>>, vector<1x8xf32>,
    return
  }
  func.func @transform_0(%arg0: i32) -> (i32, i32) {
    %c0_i32 = arith.constant 0 : i32
    %c0_i32_0 = arith.constant 0 : i32
    return %arg0, %c0_i32 : i32, i32
  }
  func.func @transform_1(%arg0: i32) -> (i32, i32) {
    %c0_i32 = arith.constant 0 : i32
    %c0_i32_0 = arith.constant 0 : i32
    %c0_i32_1 = arith.constant 0 : i32
    return %c0_i32, %c0_i32_0 : i32, i32
  }
  func.func @transform_2(%arg0: i32) -> (i32, i32) {
    %c0_i32 = arith.constant 0 : i32
    %c0_i32_0 = arith.constant 0 : i32
    %c0_i32_1 = arith.constant 0 : i32
    return %c0_i32, %c0_i32_0 : i32, i32
  }
  func.func @transform_3(%arg0: i32) -> (i32, i32) {
    %c0_i32 = arith.constant 0 : i32
    %c0_i32_0 = arith.constant 0 : i32
    return %c0_i32, %arg0 : i32, i32
  }
  func.func @transform_4(%arg0: i32) -> (i32, i32) {
    %c0_i32 = arith.constant 0 : i32
    %c0_i32_0 = arith.constant 0 : i32
    return %c0_i32, %arg0 : i32, i32
  }
}

</mosaic_0001>

<llo_original>
// kernel: tpu_custom_call.1
$region0: #{tpu_custom_call.1}
  #allocation0 [shape = 'u32[]', space=smem, size = 0x4, offset = 0x4, fixed_abs, tag = 'smem constant byte address 0x4 - core index']
  #allocation1 [shape = 'u32[144,128]{1,0:T(1,128)}', space=vmem, size = 0x12000, scoped, tag = 'internal scratch']
  %s0 = inlined_call_operand.hbm [shape: f32[8,32], index: 0, kind: input, shape index: {}]
  %s1 = inlined_call_operand.vmem [shape: f32[4,32], index: 1, kind: input, shape index: {}]
  %s2 = inlined_call_operand.vmem [shape: f32[4,1], index: 2, kind: input, shape index: {}]
  %s3 = inlined_call_operand.vmem [shape: s32[1,8], index: 3, kind: input, shape index: {}]
  %s4 = inlined_call_operand.hbm [shape: f32[1,8], index: 4, kind: output, shape index: {}]
  %s5 = sld [smem:[#allocation0]]
  $region30: #{tpu_custom_call.1} parent=0
    _
  %s7 = ssub.s32 1, %s5
  %s8 = scalar_select 0, %s7, %s5
  $region1: #{tpu_custom_call.1} parent=0
    #allocation2 [shape = 'u8[4096]{0}', space=vmem, size = 0x1000, scoped, tag = 'input window, operand 0, single buffered']
    #allocation3 [shape = 's32[1]{0}', space=sflag, size = 0x4, scoped, tag = 'scoped memory for tpu_custom_call.1']
    #allocation4 [shape = 's32[1]{0}', space=sflag, size = 0x4, scoped, tag = 'scoped memory for tpu_custom_call.1']
    #allocation5 [shape = 'u8[512]{0}', space=vmem, size = 0x400, scoped, tag = 'output window, operand 0, single buffered']
    %9 = vsyncpa [#allocation3], 0
    %10 = vsyncpa [#allocation4], 0
    // Predicated region
    $region2: #{tpu_custom_call.1} parent=1 // pred_check
      _
    $region3: #{tpu_custom_call.1} parent=1 // pred_check_branch
      %12 = sbr.rel (0) target = $region5
    $region4: #{tpu_custom_call.1} parent=1 // pred_region
      %s14 = ssub.s32 128, 128
      %15 = vsyncadd [#allocation3], %s14
      %s17 = sshll.u32 [#allocation2], 4
      %s18 = int_to_ptr.vmem [resolvable:$true] %s17
      %20 = dma.hbm_to_vmem [thread:$0]  %s0, 128, %s18, [#allocation3]
    $region5: #{tpu_custom_call.1} parent=1 // pred_fallthru
      _
    // Predicated region
    $region6: #{tpu_custom_call.1} parent=1 // pred_check
      _
    $region7: #{tpu_custom_call.1} parent=1 // pred_check_branch
      %22 = sbr.rel (0) target = $region9
    $region8: #{tpu_custom_call.1} parent=1 // pred_region
      _
    $region9: #{tpu_custom_call.1} parent=1 // pred_fallthru
      _
    // Predicated region
    $region10: #{tpu_custom_call.1} parent=1 // pred_check
      _
    $region11: #{tpu_custom_call.1} parent=1 // pred_check_branch
      %24 = sbr.rel (0) target = $region13
    $region12: #{tpu_custom_call.1} parent=1 // pred_region
      _
    $region13: #{tpu_custom_call.1} parent=1 // pred_fallthru
      _
    // Predicated region
    $region14: #{tpu_custom_call.1} parent=1 // pred_check
      _
    $region15: #{tpu_custom_call.1} parent=1 // pred_check_branch
      %26 = sbr.rel (0) target = $region17
    $region16: #{tpu_custom_call.1} parent=1 // pred_region
      _
    $region17: #{tpu_custom_call.1} parent=1 // pred_fallthru
      _
    // Predicated region
    $region18: #{tpu_custom_call.1} parent=1 // pred_check
      _
    $region19: #{tpu_custom_call.1} parent=1 // pred_check_branch
      %28 = sbr.rel (0) target = $region21
    $region20: #{tpu_custom_call.1} parent=1 // pred_region
      %29 = dma.done [#allocation3], 128
    $region21: #{tpu_custom_call.1} parent=1 // pred_fallthru
      _
    %v30 = vld [vmem:[#allocation2] sm:$0xff]
    %v31 = vld [vmem:[%s1] sm:$0xf]
    %v32 = vld [vmem:[%s2] sm:$0xf]
    %v33 = vld [vmem:[%s3] sm:$0x1]
    %vm34 = vcmask 261120
    %v36 = vsel %vm34, %v31, 0
    %v39 = vsel %vm34, %v30, 0
    %41 = vmatprep.subr.mxu0 0.0
    %42 = vmatpush1.xpose.msra.mxu0 0.0
    %43 = vmatprep.subr.mxu0 0.0
    %44 = vmatpush1.xpose.msra.mxu0 0.0
    %45 = vmatprep.subr.mxu0 0.0
    %46 = vmatpush1.xpose.msra.mxu0 0.0
    %47 = vmatprep.subr.mxu0 0.0
    %48 = vmatpush1.xpose.msra.mxu0 0.0
    %49 = vmatprep.subr.mxu0 0.0
    %50 = vmatpush1.xpose.msra.mxu0 0.0
    %51 = vmatprep.subr.mxu0 0.0
    %52 = vmatpush1.xpose.msra.mxu0 0.0
    %53 = vmatprep.subr.mxu0 0.0
    %54 = vmatpush1.xpose.msra.mxu0 0.0
    %55 = vmatprep.subr.mxu0 0.0
    %56 = vmatpush1.xpose.msra.mxu0 0.0
    %57 = vmatprep.subr.mxu0 0.0
    %58 = vmatpush1.xpose.msra.mxu0 0.0
    %59 = vmatprep.subr.mxu0 0.0
    %60 = vmatpush1.xpose.msra.mxu0 0.0
    %61 = vmatprep.subr.mxu0 0.0
    %62 = vmatpush1.xpose.msra.mxu0 0.0
    %63 = vmatprep.subr.mxu0 0.0
    %64 = vmatpush1.xpose.msra.mxu0 0.0
    %65 = vmatprep.subr.mxu0 0.0
    %66 = vmatpush1.xpose.msra.mxu0 0.0
    %67 = vmatprep.subr.mxu0 0.0
    %68 = vmatpush1.xpose.msra.mxu0 0.0
    %69 = vmatprep.subr.mxu0 0.0
    %70 = vmatpush1.xpose.msra.mxu0 0.0
    %71 = vmatprep.subr.mxu0 0.0
    %72 = vmatpush1.xpose.msra.mxu0 %v39
    %73 = vmatprep.subr.mxu0 0.0
    %74 = vmatpush2.xpose.msra.mxu0 0.0
    %75 = vmatprep.subr.mxu0 0.0
    %76 = vmatpush2.xpose.msra.mxu0 0.0
    %77 = vmatprep.subr.mxu0 0.0
    %78 = vmatpush2.xpose.msra.mxu0 0.0
    %79 = vmatprep.subr.mxu0 0.0
    %80 = vmatpush2.xpose.msra.mxu0 0.0
    %81 = vmatprep.subr.mxu0 0.0
    %82 = vmatpush2.xpose.msra.mxu0 0.0
    %83 = vmatprep.subr.mxu0 0.0
    %84 = vmatpush2.xpose.msra.mxu0 0.0
    %85 = vmatprep.subr.mxu0 0.0
    %86 = vmatpush2.xpose.msra.mxu0 0.0
    %87 = vmatprep.subr.mxu0 0.0
    %88 = vmatpush2.xpose.msra.mxu0 0.0
    %89 = vmatprep.subr.mxu0 0.0
    %90 = vmatpush2.xpose.msra.mxu0 0.0
    %91 = vmatprep.subr.mxu0 0.0
    %92 = vmatpush2.xpose.msra.mxu0 0.0
    %93 = vmatprep.subr.mxu0 0.0
    %94 = vmatpush2.xpose.msra.mxu0 0.0
    %95 = vmatprep.subr.mxu0 0.0
    %96 = vmatpush2.xpose.msra.mxu0 0.0
    %97 = vmatprep.subr.mxu0 0.0
    %98 = vmatpush2.xpose.msra.mxu0 0.0
    %99 = vmatprep.subr.mxu0 0.0
    %100 = vmatpush2.xpose.msra.mxu0 0.0
    %101 = vmatprep.subr.mxu0 0.0
    %102 = vmatpush2.xpose.msra.mxu0 0.0
    %103 = vmatprep.subr.mxu0 0.0
    %104 = vmatpush2.xpose.msra.mxu0 0.0
    %105 = vmatprep.mubr.f32.mxu0 0.0
    %106 = vmatmul.mubr.f32.gmra.mxu0 %v36
    %v107 = vpop.f32.mrf.mxu0
    %v108 = vadd.f32 0.0, %v107
    %v109 = vpop.f32.mrf.mxu0
    %110 = vdwg.mxu0
    %v111 = vmul.f32 %v30, %v30
    %v113 = vsel %vm34, 1.0, 0
    %v116 = vsel %vm34, %v111, 0
    %118 = vmatprep.subr.mxu0 0.0
    %119 = vmatpush1.xpose.msra.mxu0 0.0
    %120 = vmatprep.subr.mxu0 0.0
    %121 = vmatpush1.xpose.msra.mxu0 0.0
    %122 = vmatprep.subr.mxu0 0.0
    %123 = vmatpush1.xpose.msra.mxu0 0.0
    %124 = vmatprep.subr.mxu0 0.0
    %125 = vmatpush1.xpose.msra.mxu0 0.0
    %126 = vmatprep.subr.mxu0 0.0
    %127 = vmatpush1.xpose.msra.mxu0 0.0
    %128 = vmatprep.subr.mxu0 0.0
    %129 = vmatpush1.xpose.msra.mxu0 0.0
    %130 = vmatprep.subr.mxu0 0.0
    %131 = vmatpush1.xpose.msra.mxu0 0.0
    %132 = vmatprep.subr.mxu0 0.0
    %133 = vmatpush1.xpose.msra.mxu0 0.0
    %134 = vmatprep.subr.mxu0 0.0
    %135 = vmatpush1.xpose.msra.mxu0 0.0
    %136 = vmatprep.subr.mxu0 0.0
    %137 = vmatpush1.xpose.msra.mxu0 0.0
    %138 = vmatprep.subr.mxu0 0.0
    %139 = vmatpush1.xpose.msra.mxu0 0.0
    %140 = vmatprep.subr.mxu0 0.0
    %141 = vmatpush1.xpose.msra.mxu0 0.0
    %142 = vmatprep.subr.mxu0 0.0
    %143 = vmatpush1.xpose.msra.mxu0 0.0
    %144 = vmatprep.subr.mxu0 0.0
    %145 = vmatpush1.xpose.msra.mxu0 0.0
    %146 = vmatprep.subr.mxu0 0.0
    %147 = vmatpush1.xpose.msra.mxu0 0.0
    %148 = vmatprep.subr.mxu0 0.0
    %149 = vmatpush1.xpose.msra.mxu0 %v116
    %150 = vmatprep.subr.mxu0 0.0
    %151 = vmatpush2.xpose.msra.mxu0 0.0
    %152 = vmatprep.subr.mxu0 0.0
    %153 = vmatpush2.xpose.msra.mxu0 0.0
    %154 = vmatprep.subr.mxu0 0.0
    %155 = vmatpush2.xpose.msra.mxu0 0.0
    %156 = vmatprep.subr.mxu0 0.0
    %157 = vmatpush2.xpose.msra.mxu0 0.0
    %158 = vmatprep.subr.mxu0 0.0
    %159 = vmatpush2.xpose.msra.mxu0 0.0
    %160 = vmatprep.subr.mxu0 0.0
    %161 = vmatpush2.xpose.msra.mxu0 0.0
    %162 = vmatprep.subr.mxu0 0.0
    %163 = vmatpush2.xpose.msra.mxu0 0.0
    %164 = vmatprep.subr.mxu0 0.0
    %165 = vmatpush2.xpose.msra.mxu0 0.0
    %166 = vmatprep.subr.mxu0 0.0
    %167 = vmatpush2.xpose.msra.mxu0 0.0
    %168 = vmatprep.subr.mxu0 0.0
    %169 = vmatpush2.xpose.msra.mxu0 0.0
    %170 = vmatprep.subr.mxu0 0.0
    %171 = vmatpush2.xpose.msra.mxu0 0.0
    %172 = vmatprep.subr.mxu0 0.0
    %173 = vmatpush2.xpose.msra.mxu0 0.0
    %174 = vmatprep.subr.mxu0 0.0
    %175 = vmatpush2.xpose.msra.mxu0 0.0
    %176 = vmatprep.subr.mxu0 0.0
    %177 = vmatpush2.xpose.msra.mxu0 0.0
    %178 = vmatprep.subr.mxu0 0.0
    %179 = vmatpush2.xpose.msra.mxu0 0.0
    %180 = vmatprep.subr.mxu0 0.0
    %181 = vmatpush2.xpose.msra.mxu0 0.0
    %182 = vmatprep.mubr.f32.mxu0 0.0
    %183 = vmatmul.mubr.f32.gmra.mxu0 %v113
    %v184 = vpop.f32.mrf.mxu0
    %v185 = vadd.f32 0.0, %v184
    %v186 = vpop.f32.mrf.mxu0
    %187 = vdwg.mxu0
    %189 = vset.pattern.permute.xlu0 0
    %190 = vperm.xlu0 %189, %v32
    %v191 = vpop.permute.xlu0 %190
    %v193 = vlaneseq
    %v194 = vshrl.u32 %v193, 7
    %v195 = vsub.s32 0, %v194
    %v196 = vrot.slane %v185, %v195
    %v197 = vadd.f32 %v191, %v196
    %v198 = vmul.f32 %v108, 2.0
    %v199 = vsub.f32 %v197, %v198
    %v200 = vmax.f32 %v199, 0.0
    %v201 = vlaneseq
    %v202 = vshrl.u32 %v201, 7
    %v203 = vlaneseq
    %v204 = vshrl.u32 %v203, 7
    %v205 = vsub.s32 0, %v204
    %v206 = vrot.slane %v33, %v205
    %vm207 = vcmp.eq.s32.totalorder %v202, %v206
    %v208 = vsel %vm207, %v200, 0.0
    %vm209 = vcmask 60416
    %v210 = vsel %vm209, %v208, 0.0
    %v211 = vrot.slane %v210, 4
    %v212 = vadd.f32 %v210, %v211
    %v213 = vrot.slane %v212, 2
    %v214 = vadd.f32 %v212, %v213
    %v215 = vrot.slane %v214, 1
    %v216 = vadd.f32 %v214, %v215
    %v217 = vrsqrt.pop %v200
    %v218 = vmul.f32 %v200, %v217
    %vm219 = vcmp.eq.f32.partialorder %v200, inf
    %v220 = vsel %vm219, %v200, %v218
    %vm221 = vcmp.eq.f32.partialorder %v200, 0.0
    %v222 = vand.u32 %v200, 2147483648
    %v223 = vsel %vm221, %v222, %v220
    %v224 = vsub.f32 0.0, %v223
    %v225 = vsel %vm209, %v224, -inf
    %v226 = vrot.slane %v225, 4
    %v227 = vmax.f32 %v225, %v226
    %v228 = vrot.slane %v227, 2
    %v229 = vmax.f32 %v227, %v228
    %v230 = vrot.slane %v229, 1
    %v231 = vmax.f32 %v229, %v230
    %v232 = vsub.f32 %v224, %v231
    %v233 = vmul.f32 %v232, 1.442695
    %v234 = vpow.pop %v233
    %v235 = vsel %vm209, %v234, 0.0
    %v236 = vrot.slane %v235, 4
    %v237 = vadd.f32 %v235, %v236
    %v238 = vrot.slane %v237, 2
    %v239 = vadd.f32 %v237, %v238
    %v240 = vrot.slane %v239, 1
    %v241 = vadd.f32 %v239, %v240
    %v242 = vlog2.pop %v241
    %v243 = vmul.f32 %v242, 0.6931472
    %v244 = vadd.f32 %v231, %v243
    %v245 = vadd.f32 %v216, %v244
    %vm246 = vcmask 57344
    %247 = vst.msk [vmem:[#allocation5] sm:$0x1] %vm246, %v245
    // Predicated region
    $region22: #{tpu_custom_call.1} parent=1 // pred_check
      _
    $region23: #{tpu_custom_call.1} parent=1 // pred_check_branch
      %249 = sbr.rel (0) target = $region25
    $region24: #{tpu_custom_call.1} parent=1 // pred_region
      %s251 = ssub.s32 16, 16
      %252 = vsyncadd [#allocation4], %s251
      %s254 = sshll.u32 [#allocation5], 4
      %s255 = int_to_ptr.vmem [resolvable:$true] %s254
      %257 = dma.vmem_to_hbm [thread:$0]  %s255, 16, %s4, [#allocation4]
    $region25: #{tpu_custom_call.1} parent=1 // pred_fallthru
      _
    // Predicated region
    $region26: #{tpu_custom_call.1} parent=1 // pred_check
      _
    $region27: #{tpu_custom_call.1} parent=1 // pred_check_branch
      %259 = sbr.rel (0) target = $region29
    $region28: #{tpu_custom_call.1} parent=1 // pred_region
      %260 = dma.done [#allocation4], 16
    $region29: #{tpu_custom_call.1} parent=1 // pred_fallthru
      _
    %261 = vsyncpa [#allocation3], 1
    %262 = vsyncpa [#allocation4], 1

</llo_original>
